<compile_context>
chip_gen: v7x
topology: tpu7x:2x2x1
jax: 0.10.0
libtpu: 0.0.40
codegen_flags: <defaults>
</compile_context>

<pallas_src>
import numpy as np
import jax
import jax.numpy as jnp
from jax.experimental import pallas as pl
from jax.experimental.pallas import tpu as pltpu


def _cdiv(a, b):
    return -(-a // b)


# ----------------------------- parameter construction (deterministic) -----------------------------

def _hz_to_mel_slaney(f):
    f = np.asarray(f, dtype=np.float64)
    mels = 3.0 * f / 200.0
    min_log_hz = 1000.0
    min_log_mel = 15.0
    logstep = np.log(6.4) / 27.0
    return np.where(f >= min_log_hz,
                    min_log_mel + np.log(np.maximum(f, 1e-10) / min_log_hz) / logstep,
                    mels)


def _mel_to_hz_slaney(m):
    m = np.asarray(m, dtype=np.float64)
    freqs = 200.0 * m / 3.0
    min_log_hz = 1000.0
    min_log_mel = 15.0
    logstep = np.log(6.4) / 27.0
    return np.where(m >= min_log_mel,
                    min_log_hz * np.exp(logstep * (m - min_log_mel)),
                    freqs)


def melscale_fbanks_slaney(n_freqs, f_min, f_max, n_mels, sample_rate):
    """Equivalent of torchaudio melscale_fbanks(norm='slaney', mel_scale='slaney').
    Returns (n_freqs, n_mels) float32."""
    all_freqs = np.linspace(0.0, sample_rate / 2.0, n_freqs)
    m_min = _hz_to_mel_slaney(f_min)
    m_max = _hz_to_mel_slaney(f_max)
    m_pts = np.linspace(m_min, m_max, n_mels + 2)
    f_pts = _mel_to_hz_slaney(m_pts)
    f_diff = f_pts[1:] - f_pts[:-1]                         # (n_mels+1,)
    slopes = f_pts[None, :] - all_freqs[:, None]            # (n_freqs, n_mels+2)
    down = -slopes[:, :-2] / f_diff[:-1]
    up = slopes[:, 2:] / f_diff[1:]
    fb = np.maximum(0.0, np.minimum(down, up))              # (n_freqs, n_mels)
    enorm = 2.0 / (f_pts[2:n_mels + 2] - f_pts[:n_mels])    # slaney area normalization
    fb = fb * enorm[None, :]
    return fb.astype(np.float32)


def make_dft_matrices(n_fft, win_length):
    """Windowed real-DFT matrices. Returns (wcos, wsin): each (n_fft, n_fft//2+1) float32."""
    assert win_length == n_fft, "win_length < n_fft padding not needed for this config"
    # TODO(synk): support win_length < n_fft (center-pad window inside the DFT matrix).
    n = np.arange(n_fft, dtype=np.float64)
    # periodic Hann (torch.hann_window default)
    window = 0.5 * (1.0 - np.cos(2.0 * np.pi * n / win_length))
    k = np.arange(n_fft // 2 + 1, dtype=np.float64)
    ang = 2.0 * np.pi * np.outer(n, k) / n_fft              # (n_fft, n_freq)
    wcos = (window[:, None] * np.cos(ang)).astype(np.float32)
    wsin = (-window[:, None] * np.sin(ang)).astype(np.float32)
    return wcos, wsin


# ----------------------------- Pallas kernel -----------------------------

def logmel_kernel(c0_ref, c1_ref, wt_ref, fbt_ref, out_ref):
    # c0_ref : (1, hop, TF)     current tile of hop-sized chunks; chunk index on the lane axis
    # c1_ref : (1, hop, TL)     first TL (=128) chunks of the next tile (overlap tail)
    # wt_ref : (2*nfp, n_fft)   fused transposed windowed-DFT matrix [wcos ; wsin], freq rows 0-padded
    # fbt_ref: (n_mels, nfp)    transposed slaney mel filterbank, freq cols 0-padded
    # out_ref: (1, n_mels, TF)  log-mel already in (mel, frame) layout (lane-dense frames)
    hop = c0_ref.shape[1]
    tf = c0_ref.shape[2]
    n_fft = wt_ref.shape[1]
    nfp = wt_ref.shape[0] // 2
    r = n_fft // hop                                          # chunks per frame

    c0 = c0_ref[0]                                            # (hop, TF)
    if r > 1:
        # span lanes f cover chunk indices [j*TF, j*TF + TF + TL)
        span = jnp.concatenate([c0, c1_ref[0]], axis=1)       # (hop, TF + TL)
        w = span.shape[1]
        # frame f, tap c*hop + s  ==  chunk (f + c), sample s  ==  span[s, f + c]
        strips = [c0] + [pltpu.roll(span, w - c, 1)[:, :tf] for c in range(1, r)]
        xT = jnp.concatenate(strips, axis=0)                  # (n_fft, TF), sublane-stacked
    else:
        xT = c0                                               # non-overlapping frames

    # single fused windowed-DFT matmul: rows [0:nfp)=real, [nfp:2nfp)=imag (0-padded freqs)
    specT = jnp.dot(wt_ref[...], xT.astype(wt_ref.dtype),
                    preferred_element_type=jnp.float32)       # (2*nfp, TF)
    reT = specT[:nfp, :]
    imT = specT[nfp:, :]
    magT = jnp.sqrt(reT * reT + imT * imT)                    # power=1.0 magnitude, (nfp, TF)

    # mel^T = fb^T @ mag^T, contracting the (padded) frequency axis
    mel_t = jnp.dot(fbt_ref[...], magT.astype(fbt_ref.dtype),
                    preferred_element_type=jnp.float32)       # (n_mels, TF)
    out_ref[0] = jnp.log(jnp.maximum(mel_t, 1e-5))


def log_mel_spectrogram(wav, *, sample_rate, n_fft, hop_length, win_length, n_mels,
                        tile_frames=1024, matmul_dtype=jnp.float32):
    """wav: (B, T) float32 -> logmel (B, n_mels, n_frames) float32.  center=False."""
    B, T = wav.shape
    assert tile_frames % 128 == 0
    assert n_fft % hop_length == 0, "in-kernel framing assumes hop_length | n_fft"
    # TODO(synk): support hop_length that does not divide n_fft (gcd-sized chunking),
    #             and center=True (extra n_fft//2 reflect pad inside MelSpectrogram).

    pad = (n_fft - hop_length) // 2
    n_freq = n_fft // 2 + 1
    nfp = 128 * _cdiv(n_freq, 128)                           # lane-padded freq bins
    r = n_fft // hop_length
    assert r - 1 <= 128, "overlap tail wider than 128 chunks not supported"
    TL = 128                                                 # overlap-tail lanes (>= r-1, divides TF)

    # glue: reflect pad (F.pad 'reflect'); framing itself happens in-kernel
    wav_p = jnp.pad(wav, ((0, 0), (pad, pad)), mode="reflect")
    L = T + 2 * pad
    n_frames = 1 + (L - n_fft) // hop_length

    # frame tiling (TF multiple of 128 so chunk-index / output lane dims are dense)
    TF = min(tile_frames, 128 * _cdiv(n_frames, 128))
    n_tiles = _cdiv(n_frames, TF)
    # v7x has 2 TensorCores: keep >= 2 parallel grid points for single-clip inputs
    if B == 1 and n_tiles == 1 and TF > 128:
        TF = 128 * _cdiv(_cdiv(n_frames, 2), 128)
        n_tiles = _cdiv(n_frames, TF)
    n_frames_pad = n_tiles * TF

    # chunked waveform, zero-padded on the right so the tail block (j+1 tile start) is in range
    n_chunks = max(n_tiles * TF + TL, _cdiv(L, hop_length))
    total = n_chunks * hop_length
    wav_pp = jnp.pad(wav_p, ((0, 0), (0, total - L)))
    # lane-dense layout: chunk index on the 128-lane axis, in-chunk sample on sublanes
    chunks = jnp.transpose(wav_pp.reshape(B, n_chunks, hop_length), (0, 2, 1))  # (B, hop, n_chunks)

    # fused, lane-padded transposed DFT matrix and transposed, lane-padded mel filterbank
    wcos, wsin = make_dft_matrices(n_fft, win_length)        # (n_fft, n_freq) each
    WT = np.zeros((2 * nfp, n_fft), dtype=np.float32)
    WT[:n_freq, :] = wcos.T
    WT[nfp:nfp + n_freq, :] = wsin.T
    fb = melscale_fbanks_slaney(n_freq, 0.0, sample_rate / 2.0, n_mels, sample_rate)
    fbT = np.zeros((n_mels, nfp), dtype=np.float32)
    fbT[:, :n_freq] = fb.T
    WT = jnp.asarray(WT, dtype=matmul_dtype)                 # bf16 opt-in MXU path
    fbT = jnp.asarray(fbT, dtype=matmul_dtype)

    flops = int(2 * B * n_frames_pad * (n_fft * 2 * nfp + nfp * n_mels))
    transcendentals = int(B * n_frames_pad * (nfp + n_mels))
    bytes_accessed = int(4 * B * n_tiles * (TF + TL) * hop_length
                         + int(WT.size) * WT.dtype.itemsize
                         + int(fbT.size) * fbT.dtype.itemsize
                         + 4 * B * n_mels * n_frames_pad)

    out = pl.pallas_call(
        logmel_kernel,
        out_shape=jax.ShapeDtypeStruct((B, n_mels, n_frames_pad), jnp.float32),
        grid_spec=pltpu.PrefetchScalarGridSpec(
            num_scalar_prefetch=0,
            grid=(B, n_tiles),
            in_specs=[
                pl.BlockSpec((1, hop_length, TF), lambda b, j: (b, 0, j)),                  # current tile
                pl.BlockSpec((1, hop_length, TL), lambda b, j: (b, 0, (j + 1) * (TF // TL))),  # overlap tail
                pl.BlockSpec((2 * nfp, n_fft), lambda b, j: (0, 0)),                        # fused DFT^T (resident)
                pl.BlockSpec((n_mels, nfp), lambda b, j: (0, 0)),                           # mel fb^T (resident)
            ],
            out_specs=pl.BlockSpec((1, n_mels, TF), lambda b, j: (b, 0, j)),
        ),
        compiler_params=pltpu.CompilerParams(
            dimension_semantics=("parallel", "parallel"),
            vmem_limit_bytes=32 * 1024 * 1024,
        ),
        cost_estimate=pl.CostEstimate(flops=flops, transcendentals=transcendentals,
                                      bytes_accessed=bytes_accessed),
    )(chunks, chunks, WT, fbT)

    # drop padded frames; output is already in PyTorch layout (B, n_mels, n_frames)
    return out[:, :, :n_frames]


# ----------------------------- pure-JAX reference (for sanity) -----------------------------

def log_mel_reference(wav, *, sample_rate, n_fft, hop_length, win_length, n_mels):
    pad = (n_fft - hop_length) // 2
    n_freq = n_fft // 2 + 1
    wav_p = jnp.pad(wav, ((0, 0), (pad, pad)), mode="reflect")
    L = wav.shape[1] + 2 * pad
    n_frames = 1 + (L - n_fft) // hop_length
    idx = (np.arange(n_frames)[:, None] * hop_length + np.arange(n_fft)[None, :])
    frames = wav_p[:, idx]
    wcos, wsin = make_dft_matrices(n_fft, win_length)
    fb = melscale_fbanks_slaney(n_freq, 0.0, sample_rate / 2.0, n_mels, sample_rate)
    re = frames @ wcos
    im = frames @ wsin
    mag = jnp.sqrt(re * re + im * im)
    mel = mag @ fb
    return jnp.transpose(jnp.log(jnp.maximum(mel, 1e-5)), (0, 2, 1))


if __name__ == "__main__":
    # small, deterministic config
    sample_rate = 16000
    n_fft = 128
    hop_length = 32
    win_length = 128
    n_mels = 16
    B, T = 2, 512

    key = jax.random.PRNGKey(0)
    wav = jax.random.normal(key, (B, T), dtype=jnp.float32)

    out = log_mel_spectrogram(
        wav, sample_rate=sample_rate, n_fft=n_fft, hop_length=hop_length,
        win_length=win_length, n_mels=n_mels)
    out = jax.block_until_ready(out)

    ref = log_mel_reference(
        wav, sample_rate=sample_rate, n_fft=n_fft, hop_length=hop_length,
        win_length=win_length, n_mels=n_mels)
    np.testing.assert_allclose(np.asarray(out), np.asarray(ref), rtol=1e-4, atol=1e-4)

    expected_frames = 1 + (T + 2 * ((n_fft - hop_length) // 2) - n_fft) // hop_length
    assert out.shape == (B, n_mels, expected_frames)
    print("KERNEL_OK")
</pallas_src>

<mosaic_0001>
module attributes {stable_mosaic.version = 11 : i64} {
  func.func @logmel_kernel(%arg0: i32, %arg1: i32, %arg2: memref<1x32x128xf32, #tpu.memory_space<vmem>>, %arg3: memref<1x32x128xf32, #tpu.memory_space<vmem>>, %arg4: memref<256x128xf32, #tpu.memory_space<vmem>>, %arg5: memref<16x128xf32, #tpu.memory_space<vmem>>, %arg6: memref<1x16x128xf32, #tpu.memory_space<vmem>>) attributes {dimension_semantics = [#tpu.dimension_semantics<parallel>, #tpu.dimension_semantics<parallel>], iteration_bounds = array<i64: 2, 1>, scalar_prefetch = 0 : i64, scratch_operands = 0 : i64, tpu.core_type = #tpu.core_type<tc>, window_params = [{transform_indices = @transform_0, window_bounds = array<i64: 1, 32, 128>}, {transform_indices = @transform_1, window_bounds = array<i64: 1, 32, 128>}, {pipeline_mode = #tpu.pipeline_mode<synchronous>, transform_indices = @transform_2, window_bounds = array<i64: 256, 128>}, {pipeline_mode = #tpu.pipeline_mode<synchronous>, transform_indices = @transform_3, window_bounds = array<i64: 16, 128>}, {transform_indices = @transform_4, window_bounds = array<i64: 1, 16, 128>}]} {
    %c0 = arith.constant 0 : index
    %c0_0 = arith.constant 0 : index
    %c0_1 = arith.constant 0 : index
    %0 = vector.load %arg2[%c0, %c0_0, %c0_1] : memref<1x32x128xf32, #tpu.memory_space<vmem>>, vector<1x32x128xf32>
    %1 = vector.shape_cast %0 : vector<1x32x128xf32> to vector<32x128xf32>
    %c0_2 = arith.constant 0 : index
    %c0_3 = arith.constant 0 : index
    %c0_4 = arith.constant 0 : index
    %2 = vector.load %arg3[%c0_2, %c0_3, %c0_4] : memref<1x32x128xf32, #tpu.memory_space<vmem>>, vector<1x32x128xf32>
    %3 = vector.shape_cast %2 : vector<1x32x128xf32> to vector<32x128xf32>
    %4 = tpu.concatenate %1, %3 in 1 : vector<32x128xf32>, vector<32x128xf32> -> vector<32x256xf32>
    %c255_i32 = arith.constant 255 : i32
    %5 = tpu.dynamic_rotate %4 by %c255_i32 dim 1 : vector<32x256xf32>, i32 -> vector<32x256xf32>
    %6 = vector.extract_strided_slice %5 {offsets = [0, 0], sizes = [32, 128], strides = [1, 1]} : vector<32x256xf32> to vector<32x128xf32>
    %c254_i32 = arith.constant 254 : i32
    %7 = tpu.dynamic_rotate %4 by %c254_i32 dim 1 : vector<32x256xf32>, i32 -> vector<32x256xf32>
    %8 = vector.extract_strided_slice %7 {offsets = [0, 0], sizes = [32, 128], strides = [1, 1]} : vector<32x256xf32> to vector<32x128xf32>
    %c253_i32 = arith.constant 253 : i32
    %9 = tpu.dynamic_rotate %4 by %c253_i32 dim 1 : vector<32x256xf32>, i32 -> vector<32x256xf32>
    %10 = vector.extract_strided_slice %9 {offsets = [0, 0], sizes = [32, 128], strides = [1, 1]} : vector<32x256xf32> to vector<32x128xf32>
    %11 = tpu.concatenate %1, %6, %8, %10 in 0 : vector<32x128xf32>, vector<32x128xf32>, vector<32x128xf32>, vector<32x128xf32> -> vector<128x128xf32>
    %c0_5 = arith.constant 0 : index
    %c0_6 = arith.constant 0 : index
    %12 = vector.load %arg4[%c0_5, %c0_6] : memref<256x128xf32, #tpu.memory_space<vmem>>, vector<256x128xf32>
    %cst = arith.constant dense<0.000000e+00> : vector<256x128xf32>
    %13 = tpu.matmul %12, %11, %cst {dimension_numbers = #tpu.dot_dimension_numbers<[1], [0], [0], [1], [0, 0, 1, 1], [], []>} : vector<256x128xf32>, vector<128x128xf32>, vector<256x128xf32> -> vector<256x128xf32>
    %14 = vector.extract_strided_slice %13 {offsets = [0, 0], sizes = [128, 128], strides = [1, 1]} : vector<256x128xf32> to vector<128x128xf32>
    %15 = vector.extract_strided_slice %13 {offsets = [128, 0], sizes = [128, 128], strides = [1, 1]} : vector<256x128xf32> to vector<128x128xf32>
    %16 = arith.mulf %14, %14 : vector<128x128xf32>
    %17 = arith.mulf %15, %15 : vector<128x128xf32>
    %18 = arith.addf %16, %17 : vector<128x128xf32>
    %19 = math.sqrt %18 : vector<128x128xf32>
    %c0_7 = arith.constant 0 : index
    %c0_8 = arith.constant 0 : index
    %20 = vector.load %arg5[%c0_7, %c0_8] : memref<16x128xf32, #tpu.memory_space<vmem>>, vector<16x128xf32>
    %cst_9 = arith.constant dense<0.000000e+00> : vector<16x128xf32>
    %21 = tpu.matmul %20, %19, %cst_9 {dimension_numbers = #tpu.dot_dimension_numbers<[1], [0], [0], [1], [0, 0, 1, 1], [], []>} : vector<16x128xf32>, vector<128x128xf32>, vector<16x128xf32> -> vector<16x128xf32>
    %cst_10 = arith.constant 9.99999974E-6 : f32
    %22 = vector.broadcast %cst_10 : f32 to vector<16x128xf32>
    %23 = arith.maximumf %21, %22 : vector<16x128xf32>
    %24 = math.log %23 : vector<16x128xf32>
    %c0_11 = arith.constant 0 : index
    %c0_12 = arith.constant 0 : index
    %c0_13 = arith.constant 0 : index
    %25 = vector.load %arg6[%c0_11, %c0_12, %c0_13] : memref<1x16x128xf32, #tpu.memory_space<vmem>>, vector<1x16x128xf32>
    %26 = vector.shape_cast %25 : vector<1x16x128xf32> to vector<16x128xf32>
    %27 = vector.shape_cast %24 : vector<16x128xf32> to vector<1x16x128xf32>
    tpu.vector_store %arg6[%c0_11, %c0_12, %c0_13], %27 {strides = array<i32>} : memref<1x16x128xf32, #tpu.memory_space<vmem>>, vector<1x16x128xf32>,
    return
  }
  func.func @transform_0(%arg0: i32, %arg1: i32) -> (i32, i32, i32) {
    %c0_i32 = arith.constant 0 : i32
    %c0_i32_0 = arith.constant 0 : i32
    return %arg0, %c0_i32, %arg1 : i32, i32, i32
  }
  func.func @transform_1(%arg0: i32, %arg1: i32) -> (i32, i32, i32) {
    %c1_i32 = arith.constant 1 : i32
    %0 = arith.addi %arg1, %c1_i32 : i32
    %c1_i32_0 = arith.constant 1 : i32
    %1 = arith.muli %0, %c1_i32_0 : i32
    %c0_i32 = arith.constant 0 : i32
    %c0_i32_1 = arith.constant 0 : i32
    return %arg0, %c0_i32, %1 : i32, i32, i32
  }
  func.func @transform_2(%arg0: i32, %arg1: i32) -> (i32, i32) {
    %c0_i32 = arith.constant 0 : i32
    %c0_i32_0 = arith.constant 0 : i32
    %c0_i32_1 = arith.constant 0 : i32
    return %c0_i32, %c0_i32_0 : i32, i32
  }
  func.func @transform_3(%arg0: i32, %arg1: i32) -> (i32, i32) {
    %c0_i32 = arith.constant 0 : i32
    %c0_i32_0 = arith.constant 0 : i32
    %c0_i32_1 = arith.constant 0 : i32
    return %c0_i32, %c0_i32_0 : i32, i32
  }
  func.func @transform_4(%arg0: i32, %arg1: i32) -> (i32, i32, i32) {
    %c0_i32 = arith.constant 0 : i32
    %c0_i32_0 = arith.constant 0 : i32
    return %arg0, %c0_i32, %arg1 : i32, i32, i32
  }
}

</mosaic_0001>

<llo_original>
// kernel: tpu_custom_call.1
$region0: #{tpu_custom_call.1}
  #allocation0 [shape = 'u32[]', space=smem, size = 0x4, offset = 0x4, fixed_abs, tag = 'smem constant byte address 0x4 - core index']
  #allocation1 [shape = 'u32[144,128]{1,0:T(1,128)}', space=vmem, size = 0x12000, scoped, tag = 'internal scratch']
  %s0 = inlined_call_operand.hbm [shape: f32[2,32,256], index: 0, kind: input, shape index: {}]
  %s1 = inlined_call_operand.hbm [shape: f32[2,32,256], index: 1, kind: input, shape index: {}]
  %s2 = inlined_call_operand.hbm [shape: f32[256,128], index: 2, kind: input, shape index: {}]
  %s3 = inlined_call_operand.hbm [shape: f32[16,128], index: 3, kind: input, shape index: {}]
  %s4 = inlined_call_operand.hbm [shape: f32[2,16,128], index: 4, kind: output, shape index: {}]
  %s5 = sld [smem:[#allocation0]]
  $region65: #{tpu_custom_call.1} parent=0
    _
  %s7 = ssub.s32 1, %s5
  %s8 = scalar_select 0, %s7, %s5
  $region1: #{tpu_custom_call.1} parent=0
    #allocation2 [shape = 'u8[32768]{0}', space=vmem, size = 0x8000, scoped, tag = 'input window, operand 0']
    #allocation3 [shape = 's32[2]{0}', space=sflag, size = 0x8, scoped, tag = 'scoped memory for tpu_custom_call.1']
    #allocation4 [shape = 's32[2]{0}', space=sflag, size = 0x8, scoped, tag = 'scoped memory for tpu_custom_call.1']
    #allocation5 [shape = 'u8[32768]{0}', space=vmem, size = 0x8000, scoped, tag = 'input window, operand 1']
    #allocation6 [shape = 's32[2]{0}', space=sflag, size = 0x8, scoped, tag = 'scoped memory for tpu_custom_call.1']
    #allocation7 [shape = 'u8[131072]{0}', space=vmem, size = 0x20000, scoped, tag = 'input window, operand 2, single buffered']
    #allocation8 [shape = 'u8[8192]{0}', space=vmem, size = 0x2000, scoped, tag = 'input window, operand 3, single buffered']
    #allocation9 [shape = 's32[1]{0}', space=sflag, size = 0x4, scoped, tag = 'scoped memory for tpu_custom_call.1']
    #allocation10 [shape = 'u8[16384]{0}', space=vmem, size = 0x4000, scoped, tag = 'output window, operand 0']
    %9 = vsyncpa [#allocation3], 0
    %s10 = scalar_lea.sflag [#allocation3], 1
    %11 = vsyncpa %s10, 0
    %12 = vsyncpa [#allocation6], 0
    %s13 = scalar_lea.sflag [#allocation6], 1
    %14 = vsyncpa %s13, 0
    %15 = vsyncpa [#allocation9], 0
    %16 = vsyncpa [#allocation4], 0
    %s17 = scalar_lea.sflag [#allocation4], 1
    %18 = vsyncpa %s17, 0
    loop: start=0, step=1, limit=4
    $region2: #{tpu_custom_call.1} parent=1 // loop_pre_header
      _
    $region3: #{tpu_custom_call.1} parent=1 // loop_header
      %s20 = sphi 0, %s24
      %p21 = scmp.ge.s32.totalorder %s20, 4
      %s27 = sphi 0, %s39
      %s28 = sphi 0, %s35
      %s29 = sphi 0, %s27
      %s30 = sphi 0, %s28
      %s31 = sphi 0, %s29
      %s32 = sphi 0, %s30
      %s44 = sphi 0, %s46
      %s47 = sphi 0, %s44
      %s48 = sphi 0, %s47
      %s64 = sphi 0, %s48
      %s74 = sphi 0, %s76
      %s77 = sphi 0, %s74
      %s78 = sphi 0, %s77
      %s94 = sphi 0, %s78
      %s98 = sphi 0, %s98
      %s100 = sphi 0, %s98
      %s101 = sphi 0, %s100
      %s115 = sphi 0, %s101
      %s119 = sphi 0, %s119
      %s121 = sphi 0, %s119
      %s122 = sphi 0, %s121
      %s136 = sphi 0, %s122
      %s144 = sphi 0, %s146
      %s147 = sphi 0, %s144
      %s148 = sphi 0, %s147
      %s164 = sphi 0, %s148
    $region4: #{tpu_custom_call.1} parent=1 // loop_header_branch
      %23 = sbr.rel (%p21) target = $region8
    $region5: #{tpu_custom_call.1} parent=1 // loop_body
      %s25 = ssub.s32 %s20, 1
      %s26 = ssub.s32 %s20, 2
      %s33 = sadd.s32 1, %s28
      %p34 = scmp.ge.s32.totalorder %s33, 1
      %s35 = scalar_select %p34, 0, %s33
      %s36 = sadd.s32 1, %s27
      %s37 = scalar_select %p34, %s36, %s27
      %p38 = scmp.ge.s32.totalorder %s37, 2
      %s39 = scalar_select %p38, 0, %s37
      %s40 = ssub.s32 %s27, %s39
      %s41 = ssub.s32 %s28, %s35
      %s42 = sor.u32 %s40, %s41
      %p43 = scmp.eq.s32.totalorder %s42, 0
      %s45 = sadd.s32 %s44, 1
      %s46 = scalar_select %p43, %s44, %s45
      %p49 = pneg %p43
      %p50 = scmp.eq.s32.totalorder %s20, 1
      %p51 = por %p49, %p50
      %p52 = scmp.ne.s32.totalorder %s44, %s47
      %p53 = scmp.eq.s32.totalorder %s20, 0
      %p54 = por %p52, %p53
      %p55 = scmp.ne.s32.totalorder %s44, %s47
      %p56 = scmp.eq.s32.totalorder %s25, 1
      %p57 = por %p55, %p56
      %p58 = scmp.ne.s32.totalorder %s47, %s48
      %p59 = scmp.eq.s32.totalorder %s25, 0
      %p60 = por %p58, %p59
      %p61 = scmp.ne.s32.totalorder %s47, %s48
      %p62 = scmp.eq.s32.totalorder %s26, 1
      %p63 = por %p61, %p62
      %p65 = scmp.ne.s32.totalorder %s48, %s64
      %p66 = scmp.eq.s32.totalorder %s26, 0
      %p67 = por %p65, %p66
      %s68 = sadd.s32 %s28, 1
      %s69 = sadd.s32 %s35, 1
      %s70 = ssub.s32 %s27, %s39
      %s71 = ssub.s32 %s68, %s69
      %s72 = sor.u32 %s70, %s71
      %p73 = scmp.eq.s32.totalorder %s72, 0
      %s75 = sadd.s32 %s74, 1
      %s76 = scalar_select %p73, %s74, %s75
      %p79 = pneg %p73
      %p80 = scmp.eq.s32.totalorder %s20, 1
      %p81 = por %p79, %p80
      %p82 = scmp.ne.s32.totalorder %s74, %s77
      %p83 = scmp.eq.s32.totalorder %s20, 0
      %p84 = por %p82, %p83
      %p85 = scmp.ne.s32.totalorder %s74, %s77
      %p86 = scmp.eq.s32.totalorder %s25, 1
      %p87 = por %p85, %p86
      %p88 = scmp.ne.s32.totalorder %s77, %s78
      %p89 = scmp.eq.s32.totalorder %s25, 0
      %p90 = por %p88, %p89
      %p91 = scmp.ne.s32.totalorder %s77, %s78
      %p92 = scmp.eq.s32.totalorder %s26, 1
      %p93 = por %p91, %p92
      %p95 = scmp.ne.s32.totalorder %s78, %s94
      %p96 = scmp.eq.s32.totalorder %s26, 0
      %p97 = por %p95, %p96
      %s99 = sadd.s32 %s98, 1
      %p102 = scmp.eq.s32.totalorder %s20, 1
      %p103 = scmp.ne.s32.totalorder %s98, %s100
      %p104 = scmp.eq.s32.totalorder %s20, 0
      %p105 = por %p103, %p104
      %p106 = scmp.ne.s32.totalorder %s98, %s100
      %p107 = scmp.eq.s32.totalorder %s25, 1
      %p108 = por %p106, %p107
      %p109 = scmp.ne.s32.totalorder %s100, %s101
      %p110 = scmp.eq.s32.totalorder %s25, 0
      %p111 = por %p109, %p110
      %p112 = scmp.ne.s32.totalorder %s100, %s101
      %p113 = scmp.eq.s32.totalorder %s26, 1
      %p114 = por %p112, %p113
      %p116 = scmp.ne.s32.totalorder %s101, %s115
      %p117 = scmp.eq.s32.totalorder %s26, 0
      %p118 = por %p116, %p117
      %s120 = sadd.s32 %s119, 1
      %p123 = scmp.eq.s32.totalorder %s20, 1
      %p124 = scmp.ne.s32.totalorder %s119, %s121
      %p125 = scmp.eq.s32.totalorder %s20, 0
      %p126 = por %p124, %p125
      %p127 = scmp.ne.s32.totalorder %s119, %s121
      %p128 = scmp.eq.s32.totalorder %s25, 1
      %p129 = por %p127, %p128
      %p130 = scmp.ne.s32.totalorder %s121, %s122
      %p131 = scmp.eq.s32.totalorder %s25, 0
      %p132 = por %p130, %p131
      %p133 = scmp.ne.s32.totalorder %s121, %s122
      %p134 = scmp.eq.s32.totalorder %s26, 1
      %p135 = por %p133, %p134
      %p137 = scmp.ne.s32.totalorder %s122, %s136
      %p138 = scmp.eq.s32.totalorder %s26, 0
      %p139 = por %p137, %p138
      %s140 = ssub.s32 %s27, %s39
      %s141 = ssub.s32 %s28, %s35
      %s142 = sor.u32 %s140, %s141
      %p143 = scmp.eq.s32.totalorder %s142, 0
      %s145 = sadd.s32 %s144, 1
      %s146 = scalar_select %p143, %s144, %s145
      %p149 = pneg %p143
      %p150 = scmp.eq.s32.totalorder %s20, 1
      %p151 = por %p149, %p150
      %p152 = scmp.ne.s32.totalorder %s144, %s147
      %p153 = scmp.eq.s32.totalorder %s20, 0
      %p154 = por %p152, %p153
      %p155 = scmp.ne.s32.totalorder %s144, %s147
      %p156 = scmp.eq.s32.totalorder %s25, 1
      %p157 = por %p155, %p156
      %p158 = scmp.ne.s32.totalorder %s147, %s148
      %p159 = scmp.eq.s32.totalorder %s25, 0
      %p160 = por %p158, %p159
      %p161 = scmp.ne.s32.totalorder %s147, %s148
      %p162 = scmp.eq.s32.totalorder %s26, 1
      %p163 = por %p161, %p162
      %p165 = scmp.ne.s32.totalorder %s148, %s164
      %p166 = scmp.eq.s32.totalorder %s26, 0
      %p167 = por %p165, %p166
      %p168 = scmp.le.s32.totalorder 1, %s20
      %p169 = scmp.lt.s32.totalorder %s20, 3
      %p170 = pnand %p168, %p169
      %p171 = pneg %p170
      // Predicated region
      $region9: #{tpu_custom_call.1} parent=5 // pred_check
        _
      $region10: #{tpu_custom_call.1} parent=5 // pred_check_branch
        %173 = sbr.rel (%p170) target = $region12
      $region11: #{tpu_custom_call.1} parent=5 // pred_region
        %s174 = ssub.s32 %s20, 1
        // Predicated region
        $region13: #{tpu_custom_call.1} parent=11 // pred_check
          %p175 = pneg %p111
        $region14: #{tpu_custom_call.1} parent=11 // pred_check_branch
          %177 = sbr.rel (%p175) target = $region16
        $region15: #{tpu_custom_call.1} parent=11 // pred_region
          %s179 = ssub.s32 4096, 4096
          %180 = vsyncadd [#allocation6], %s179
          %s181 = sshll.u32 [#allocation7], 4
          %s182 = int_to_ptr.vmem [resolvable:$true] %s181
          %187 = dma.hbm_to_vmem [thread:$0]  %s2, 4096, %s182, [#allocation6], 128, 128, 8
        $region16: #{tpu_custom_call.1} parent=11 // pred_fallthru
          _
        // Predicated region
        $region17: #{tpu_custom_call.1} parent=11 // pred_check
          %p188 = pneg %p132
        $region18: #{tpu_custom_call.1} parent=11 // pred_check_branch
          %190 = sbr.rel (%p188) target = $region20
        $region19: #{tpu_custom_call.1} parent=11 // pred_region
          %s192 = ssub.s32 256, 256
          %193 = vsyncadd [#allocation9], %s192
          %s194 = sshll.u32 [#allocation8], 4
          %s195 = int_to_ptr.vmem [resolvable:$true] %s194
          %200 = dma.hbm_to_vmem [thread:$0]  %s3, 256, %s195, [#allocation9], 128, 128, 8
        $region20: #{tpu_custom_call.1} parent=11 // pred_fallthru
          _
      $region12: #{tpu_custom_call.1} parent=5 // pred_fallthru
        _
      %p201 = scmp.lt.s32.totalorder %s20, 2
      // Predicated region
      $region21: #{tpu_custom_call.1} parent=5 // pred_check
        %p202 = pneg %p201
      $region22: #{tpu_custom_call.1} parent=5 // pred_check_branch
        %204 = sbr.rel (%p202) target = $region24
      $region23: #{tpu_custom_call.1} parent=5 // pred_region
        // Predicated region
        $region25: #{tpu_custom_call.1} parent=23 // pred_check
          %p205 = pneg %p54
        $region26: #{tpu_custom_call.1} parent=23 // pred_check_branch
          %207 = sbr.rel (%p205) target = $region28
        $region27: #{tpu_custom_call.1} parent=23 // pred_region
          %s208 = sand.u32 %s44, 1
          %s209 = scalar_lea.sflag [#allocation3], %s208
          %s210 = sand.u32 %s44, 1
          %s211 = smul.addr %s210, 32
          %s212 = scalar_lea.vmem [#allocation2], %s211
          %s214 = ssub.s32 512, 512
          %215 = vsyncadd %s209, %s214
          %s216 = smul.addr %s27, 8
          %s217 = sadd.s32 %s28, %s216
          %s218 = smul.addr %s217, 128
          %s219 = scalar_lea.hbm %s0, %s218
          %s220 = sshll.u32 %s212, 4
          %s221 = int_to_ptr.vmem [resolvable:$true] %s220
          %226 = dma.hbm_to_vmem [thread:$0]  %s219, 512, %s221, %s209, 256, 128, 8
        $region28: #{tpu_custom_call.1} parent=23 // pred_fallthru
          _
        // Predicated region
        $region29: #{tpu_custom_call.1} parent=23 // pred_check
          %p227 = pneg %p84
        $region30: #{tpu_custom_call.1} parent=23 // pred_check_branch
          %229 = sbr.rel (%p227) target = $region32
        $region31: #{tpu_custom_call.1} parent=23 // pred_region
          %s230 = sand.u32 %s20, 1
          %s231 = scalar_lea.sflag [#allocation6], %s230
          %s232 = sand.u32 %s74, 1
          %s233 = smul.addr %s232, 32
          %s234 = scalar_lea.vmem [#allocation5], %s233
          %s235 = sadd.s32 %s28, 1
          %s237 = ssub.s32 512, 512
          %238 = vsyncadd %s231, %s237
          %s239 = smul.addr %s27, 8
          %s240 = sadd.s32 %s235, %s239
          %s241 = smul.addr %s240, 128
          %s242 = scalar_lea.hbm %s1, %s241
          %s243 = sshll.u32 %s234, 4
          %s244 = int_to_ptr.vmem [resolvable:$true] %s243
          %249 = dma.hbm_to_vmem [thread:$0]  %s242, 512, %s244, %s231, 256, 128, 8
        $region32: #{tpu_custom_call.1} parent=23 // pred_fallthru
          _
      $region24: #{tpu_custom_call.1} parent=5 // pred_fallthru
        _
      %p250 = scmp.le.s32.totalorder 1, %s20
      %p251 = scmp.lt.s32.totalorder %s20, 3
      %p252 = pnand %p250, %p251
      %p253 = pneg %p252
      // Predicated region
      $region33: #{tpu_custom_call.1} parent=5 // pred_check
        _
      $region34: #{tpu_custom_call.1} parent=5 // pred_check_branch
        %255 = sbr.rel (%p252) target = $region36
      $region35: #{tpu_custom_call.1} parent=5 // pred_region
        %s256 = ssub.s32 %s20, 1
        %s257 = sand.u32 %s47, 1
        %s258 = scalar_lea.sflag [#allocation3], %s257
        %s259 = sand.u32 %s47, 1
        %s260 = smul.addr %s259, 32
        %s261 = scalar_lea.vmem [#allocation2], %s260
        // Predicated region
        $region37: #{tpu_custom_call.1} parent=35 // pred_check
          %p262 = pneg %p60
        $region38: #{tpu_custom_call.1} parent=35 // pred_check_branch
          %264 = sbr.rel (%p262) target = $region40
        $region39: #{tpu_custom_call.1} parent=35 // pred_region
          %265 = dma.done %s258, 512
        $region40: #{tpu_custom_call.1} parent=35 // pred_fallthru
          _
        %s266 = sand.u32 %s25, 1
        %s267 = scalar_lea.sflag [#allocation6], %s266
        %s268 = sand.u32 %s77, 1
        %s269 = smul.addr %s268, 32
        %s270 = scalar_lea.vmem [#allocation5], %s269
        // Predicated region
        $region41: #{tpu_custom_call.1} parent=35 // pred_check
          %p271 = pneg %p90
        $region42: #{tpu_custom_call.1} parent=35 // pred_check_branch
          %273 = sbr.rel (%p271) target = $region44
        $region43: #{tpu_custom_call.1} parent=35 // pred_region
          %274 = dma.done %s267, 512
        $region44: #{tpu_custom_call.1} parent=35 // pred_fallthru
          _
        // Predicated region
        $region45: #{tpu_custom_call.1} parent=35 // pred_check
          %p275 = pneg %p111
        $region46: #{tpu_custom_call.1} parent=35 // pred_check_branch
          %277 = sbr.rel (%p275) target = $region48
        $region47: #{tpu_custom_call.1} parent=35 // pred_region
          %278 = dma.done [#allocation6], 4096
        $region48: #{tpu_custom_call.1} parent=35 // pred_fallthru
          _
        // Predicated region
        $region49: #{tpu_custom_call.1} parent=35 // pred_check
          %p279 = pneg %p132
        $region50: #{tpu_custom_call.1} parent=35 // pred_check_branch
          %281 = sbr.rel (%p279) target = $region52
        $region51: #{tpu_custom_call.1} parent=35 // pred_region
          %282 = dma.done [#allocation9], 256
        $region52: #{tpu_custom_call.1} parent=35 // pred_fallthru
          _
        %s283 = sand.u32 %s47, 1
        %s284 = scalar_lea.sflag [#allocation3], %s283
        %s285 = sand.u32 %s47, 1
        %s286 = smul.addr %s285, 32
        %s287 = scalar_lea.vmem [#allocation2], %s286
        %p288 = pneg %p60
        %p289 = pneg %p57
        %s290 = sand.u32 %s25, 1
        %s291 = scalar_lea.sflag [#allocation6], %s290
        %s292 = sand.u32 %s77, 1
        %s293 = smul.addr %s292, 32
        %s294 = scalar_lea.vmem [#allocation5], %s293
        %p295 = pneg %p90
        %p296 = pneg %p87
        %p297 = pneg %p111
        %p298 = pneg %p108
        %p299 = pneg %p132
        %p300 = pneg %p129
        %p301 = pneg %p160
        %p302 = pneg %p157
        %s303 = sand.u32 %s147, 1
        %s304 = scalar_lea.sflag [#allocation4], %s303
        %s305 = sand.u32 %s147, 1
        %s306 = smul.addr %s305, 16
        %s307 = scalar_lea.vmem [#allocation10], %s306
        %s308 = sadd.s32 %s30, 1
        %v309 = vld [vmem:[%s261] sm:$0xff]
        %v310 = vld [vmem:[%s261 + $0x8] sm:$0xff]
        %v311 = vld [vmem:[%s261 + $0x10] sm:$0xff]
        %v312 = vld [vmem:[%s261 + $0x18] sm:$0xff]
        %v313 = vld [vmem:[%s270] sm:$0xff]
        %v314 = vld [vmem:[%s270 + $0x8] sm:$0xff]
        %v315 = vld [vmem:[%s270 + $0x10] sm:$0xff]
        %v316 = vld [vmem:[%s270 + $0x18] sm:$0xff]
        %317 = vrot.lane.b32.xlu0 %v309, 127
        %v318 = vpop.permute.xlu0 %317
        %319 = vrot.lane.b32.xlu0 %v310, 127
        %v320 = vpop.permute.xlu0 %319
        %321 = vrot.lane.b32.xlu0 %v311, 127
        %v322 = vpop.permute.xlu0 %321
        %323 = vrot.lane.b32.xlu0 %v312, 127
        %v324 = vpop.permute.xlu0 %323
        %325 = vrot.lane.b32.xlu0 %v313, 127
        %v326 = vpop.permute.xlu0 %325
        %327 = vrot.lane.b32.xlu0 %v314, 127
        %v328 = vpop.permute.xlu0 %327
        %329 = vrot.lane.b32.xlu0 %v315, 127
        %v330 = vpop.permute.xlu0 %329
        %331 = vrot.lane.b32.xlu0 %v316, 127
        %v332 = vpop.permute.xlu0 %331
        %v333 = vlaneseq
        %v334 = vand.u32 %v333, 127
        %vm335 = vcmp.lt.s32.totalorder %v334, 127
        %v336 = vsel %vm335, %v318, %v326
        %v337 = vsel %vm335, %v320, %v328
        %v338 = vsel %vm335, %v322, %v330
        %v339 = vsel %vm335, %v324, %v332
        %340 = vrot.lane.b32.xlu0 %v309, 126
        %v341 = vpop.permute.xlu0 %340
        %342 = vrot.lane.b32.xlu0 %v310, 126
        %v343 = vpop.permute.xlu0 %342
        %344 = vrot.lane.b32.xlu0 %v311, 126
        %v345 = vpop.permute.xlu0 %344
        %346 = vrot.lane.b32.xlu0 %v312, 126
        %v347 = vpop.permute.xlu0 %346
        %348 = vrot.lane.b32.xlu0 %v313, 126
        %v349 = vpop.permute.xlu0 %348
        %350 = vrot.lane.b32.xlu0 %v314, 126
        %v351 = vpop.permute.xlu0 %350
        %352 = vrot.lane.b32.xlu0 %v315, 126
        %v353 = vpop.permute.xlu0 %352
        %354 = vrot.lane.b32.xlu0 %v316, 126
        %v355 = vpop.permute.xlu0 %354
        %vm356 = vcmp.lt.s32.totalorder %v334, 126
        %v357 = vsel %vm356, %v341, %v349
        %v358 = vsel %vm356, %v343, %v351
        %v359 = vsel %vm356, %v345, %v353
        %v360 = vsel %vm356, %v347, %v355
        %361 = vrot.lane.b32.xlu0 %v309, 125
        %v362 = vpop.permute.xlu0 %361
        %363 = vrot.lane.b32.xlu0 %v310, 125
        %v364 = vpop.permute.xlu0 %363
        %365 = vrot.lane.b32.xlu0 %v311, 125
        %v366 = vpop.permute.xlu0 %365
        %367 = vrot.lane.b32.xlu0 %v312, 125
        %v368 = vpop.permute.xlu0 %367
        %369 = vrot.lane.b32.xlu0 %v313, 125
        %v370 = vpop.permute.xlu0 %369
        %371 = vrot.lane.b32.xlu0 %v314, 125
        %v372 = vpop.permute.xlu0 %371
        %373 = vrot.lane.b32.xlu0 %v315, 125
        %v374 = vpop.permute.xlu0 %373
        %375 = vrot.lane.b32.xlu0 %v316, 125
        %v376 = vpop.permute.xlu0 %375
        %vm377 = vcmp.lt.s32.totalorder %v334, 125
        %v378 = vsel %vm377, %v362, %v370
        %v379 = vsel %vm377, %v364, %v372
        %v380 = vsel %vm377, %v366, %v374
        %v381 = vsel %vm377, %v368, %v376
        %v382 = vld [vmem:[#allocation7] sm:$0xff]
        %v383 = vld [vmem:[#allocation7 + $0x8] sm:$0xff]
        %v384 = vld [vmem:[#allocation7 + $0x10] sm:$0xff]
        %v385 = vld [vmem:[#allocation7 + $0x18] sm:$0xff]
        %v386 = vld [vmem:[#allocation7 + $0x20] sm:$0xff]
        %v387 = vld [vmem:[#allocation7 + $0x28] sm:$0xff]
        %v388 = vld [vmem:[#allocation7 + $0x30] sm:$0xff]
        %v389 = vld [vmem:[#allocation7 + $0x38] sm:$0xff]
        %v390 = vld [vmem:[#allocation7 + $0x40] sm:$0xff]
        %v391 = vld [vmem:[#allocation7 + $0x48] sm:$0xff]
        %v392 = vld [vmem:[#allocation7 + $0x50] sm:$0xff]
        %v393 = vld [vmem:[#allocation7 + $0x58] sm:$0xff]
        %v394 = vld [vmem:[#allocation7 + $0x60] sm:$0xff]
        %v395 = vld [vmem:[#allocation7 + $0x68] sm:$0xff]
        %v396 = vld [vmem:[#allocation7 + $0x70] sm:$0xff]
        %v397 = vld [vmem:[#allocation7 + $0x78] sm:$0xff]
        %v398 = vld [vmem:[#allocation7 + $0x80] sm:$0xff]
        %v399 = vld [vmem:[#allocation7 + $0x88] sm:$0xff]
        %v400 = vld [vmem:[#allocation7 + $0x90] sm:$0xff]
        %v401 = vld [vmem:[#allocation7 + $0x98] sm:$0xff]
        %v402 = vld [vmem:[#allocation7 + $0xa0] sm:$0xff]
        %v403 = vld [vmem:[#allocation7 + $0xa8] sm:$0xff]
        %v404 = vld [vmem:[#allocation7 + $0xb0] sm:$0xff]
        %v405 = vld [vmem:[#allocation7 + $0xb8] sm:$0xff]
        %v406 = vld [vmem:[#allocation7 + $0xc0] sm:$0xff]
        %v407 = vld [vmem:[#allocation7 + $0xc8] sm:$0xff]
        %v408 = vld [vmem:[#allocation7 + $0xd0] sm:$0xff]
        %v409 = vld [vmem:[#allocation7 + $0xd8] sm:$0xff]
        %v410 = vld [vmem:[#allocation7 + $0xe0] sm:$0xff]
        %v411 = vld [vmem:[#allocation7 + $0xe8] sm:$0xff]
        %v412 = vld [vmem:[#allocation7 + $0xf0] sm:$0xff]
        %v413 = vld [vmem:[#allocation7 + $0xf8] sm:$0xff]
        %414 = vmatprep.subr.mxu0 0.0
        %415 = vmatpush1.msra.mxu0 %v309
        %416 = vmatprep.subr.mxu0 0.0
        %417 = vmatpush1.msra.mxu0 %v310
        %418 = vmatprep.subr.mxu0 0.0
        %419 = vmatpush1.msra.mxu0 %v311
        %420 = vmatprep.subr.mxu0 0.0
        %421 = vmatpush1.msra.mxu0 %v312
        %422 = vmatprep.subr.mxu0 0.0
        %423 = vmatpush1.msra.mxu0 %v336
        %424 = vmatprep.subr.mxu0 0.0
        %425 = vmatpush1.msra.mxu0 %v337
        %426 = vmatprep.subr.mxu0 0.0
        %427 = vmatpush1.msra.mxu0 %v338
        %428 = vmatprep.subr.mxu0 0.0
        %429 = vmatpush1.msra.mxu0 %v339
        %430 = vmatprep.subr.mxu0 0.0
        %431 = vmatpush1.msra.mxu0 %v357
        %432 = vmatprep.subr.mxu0 0.0
        %433 = vmatpush1.msra.mxu0 %v358
        %434 = vmatprep.subr.mxu0 0.0
        %435 = vmatpush1.msra.mxu0 %v359
        %436 = vmatprep.subr.mxu0 0.0
        %437 = vmatpush1.msra.mxu0 %v360
        %438 = vmatprep.subr.mxu0 0.0
        %439 = vmatpush1.msra.mxu0 %v378
        %440 = vmatprep.subr.mxu0 0.0
        %441 = vmatpush1.msra.mxu0 %v379
        %442 = vmatprep.subr.mxu0 0.0
        %443 = vmatpush1.msra.mxu0 %v380
        %444 = vmatprep.subr.mxu0 0.0
        %445 = vmatpush1.msra.mxu0 %v381
        %446 = vmatprep.subr.mxu0 0.0
        %447 = vmatpush1.msra.mxu0 0.0
        %448 = vmatprep.subr.mxu0 0.0
        %449 = vmatpush1.msra.mxu0 0.0
        %450 = vmatprep.subr.mxu0 0.0
        %451 = vmatpush1.msra.mxu0 0.0
        %452 = vmatprep.subr.mxu0 0.0
        %453 = vmatpush1.msra.mxu0 0.0
        %454 = vmatprep.subr.mxu0 0.0
        %455 = vmatpush1.msra.mxu0 0.0
        %456 = vmatprep.subr.mxu0 0.0
        %457 = vmatpush1.msra.mxu0 0.0
        %458 = vmatprep.subr.mxu0 0.0
        %459 = vmatpush1.msra.mxu0 0.0
        %460 = vmatprep.subr.mxu0 0.0
        %461 = vmatpush1.msra.mxu0 0.0
        %462 = vmatprep.subr.mxu0 0.0
        %463 = vmatpush1.msra.mxu0 0.0
        %464 = vmatprep.subr.mxu0 0.0
        %465 = vmatpush1.msra.mxu0 0.0
        %466 = vmatprep.subr.mxu0 0.0
        %467 = vmatpush1.msra.mxu0 0.0
        %468 = vmatprep.subr.mxu0 0.0
        %469 = vmatpush1.msra.mxu0 0.0
        %470 = vmatprep.subr.mxu0 0.0
        %471 = vmatpush1.msra.mxu0 0.0
        %472 = vmatprep.subr.mxu0 0.0
        %473 = vmatpush1.msra.mxu0 0.0
        %474 = vmatprep.subr.mxu0 0.0
        %475 = vmatpush1.msra.mxu0 0.0
        %476 = vmatprep.subr.mxu0 0.0
        %477 = vmatpush1.msra.mxu0 0.0
        %478 = vmatprep.mubr.f32.mxu0 0.0
        %479 = vmatmul.mubr.f32.gmra.mrb[0].mxu0 %v382
        %v480 = vpop.f32.mrb[0].mxu0
        %v481 = vadd.f32 0.0, %v480
        %v482 = vpop.f32.mrb[0].mxu0
        %483 = vmatprep.mubr.f32.mxu0 0.0
        %484 = vmatmul.mubr.f32.gmra.mrb[0].mxu0 %v383
        %v485 = vpop.f32.mrb[0].mxu0
        %v486 = vadd.f32 0.0, %v485
        %v487 = vpop.f32.mrb[0].mxu0
        %488 = vmatprep.mubr.f32.mxu0 0.0
        %489 = vmatmul.mubr.f32.gmra.mrb[0].mxu0 %v384
        %v490 = vpop.f32.mrb[0].mxu0
        %v491 = vadd.f32 0.0, %v490
        %v492 = vpop.f32.mrb[0].mxu0
        %493 = vmatprep.mubr.f32.mxu0 0.0
        %494 = vmatmul.mubr.f32.gmra.mrb[0].mxu0 %v385
        %v495 = vpop.f32.mrb[0].mxu0
        %v496 = vadd.f32 0.0, %v495
        %v497 = vpop.f32.mrb[0].mxu0
        %498 = vmatprep.mubr.f32.mxu0 0.0
        %499 = vmatmul.mubr.f32.gmra.mrb[0].mxu0 %v386
        %v500 = vpop.f32.mrb[0].mxu0
        %v501 = vadd.f32 0.0, %v500
        %v502 = vpop.f32.mrb[0].mxu0
        %503 = vmatprep.mubr.f32.mxu0 0.0
        %504 = vmatmul.mubr.f32.gmra.mrb[0].mxu0 %v387
        %v505 = vpop.f32.mrb[0].mxu0
        %v506 = vadd.f32 0.0, %v505
        %v507 = vpop.f32.mrb[0].mxu0
        %508 = vmatprep.mubr.f32.mxu0 0.0
        %509 = vmatmul.mubr.f32.gmra.mrb[0].mxu0 %v388
        %v510 = vpop.f32.mrb[0].mxu0
        %v511 = vadd.f32 0.0, %v510
        %v512 = vpop.f32.mrb[0].mxu0
        %513 = vmatprep.mubr.f32.mxu0 0.0
        %514 = vmatmul.mubr.f32.gmra.mrb[0].mxu0 %v389
        %v515 = vpop.f32.mrb[0].mxu0
        %v516 = vadd.f32 0.0, %v515
        %v517 = vpop.f32.mrb[0].mxu0
        %518 = vmatprep.mubr.f32.mxu0 0.0
        %519 = vmatmul.mubr.f32.gmra.mrb[0].mxu0 %v390
        %v520 = vpop.f32.mrb[0].mxu0
        %v521 = vadd.f32 0.0, %v520
        %v522 = vpop.f32.mrb[0].mxu0
        %523 = vmatprep.mubr.f32.mxu0 0.0
        %524 = vmatmul.mubr.f32.gmra.mrb[0].mxu0 %v391
        %v525 = vpop.f32.mrb[0].mxu0
        %v526 = vadd.f32 0.0, %v525
        %v527 = vpop.f32.mrb[0].mxu0
        %528 = vmatprep.mubr.f32.mxu0 0.0
        %529 = vmatmul.mubr.f32.gmra.mrb[0].mxu0 %v392
        %v530 = vpop.f32.mrb[0].mxu0
        %v531 = vadd.f32 0.0, %v530
        %v532 = vpop.f32.mrb[0].mxu0
        %533 = vmatprep.mubr.f32.mxu0 0.0
        %534 = vmatmul.mubr.f32.gmra.mrb[0].mxu0 %v393
        %v535 = vpop.f32.mrb[0].mxu0
        %v536 = vadd.f32 0.0, %v535
        %v537 = vpop.f32.mrb[0].mxu0
        %538 = vmatprep.mubr.f32.mxu0 0.0
        %539 = vmatmul.mubr.f32.gmra.mrb[0].mxu0 %v394
        %v540 = vpop.f32.mrb[0].mxu0
        %v541 = vadd.f32 0.0, %v540
        %v542 = vpop.f32.mrb[0].mxu0
        %543 = vmatprep.mubr.f32.mxu0 0.0
        %544 = vmatmul.mubr.f32.gmra.mrb[0].mxu0 %v395
        %v545 = vpop.f32.mrb[0].mxu0
        %v546 = vadd.f32 0.0, %v545
        %v547 = vpop.f32.mrb[0].mxu0
        %548 = vmatprep.mubr.f32.mxu0 0.0
        %549 = vmatmul.mubr.f32.gmra.mrb[0].mxu0 %v396
        %v550 = vpop.f32.mrb[0].mxu0
        %v551 = vadd.f32 0.0, %v550
        %v552 = vpop.f32.mrb[0].mxu0
        %553 = vmatprep.mubr.f32.mxu0 0.0
        %554 = vmatmul.mubr.f32.gmra.mrb[0].mxu0 %v397
        %v555 = vpop.f32.mrb[0].mxu0
        %v556 = vadd.f32 0.0, %v555
        %v557 = vpop.f32.mrb[0].mxu0
        %558 = vmatprep.mubr.f32.mxu0 0.0
        %559 = vmatmul.mubr.f32.gmra.mrb[0].mxu0 %v398
        %v560 = vpop.f32.mrb[0].mxu0
        %v561 = vadd.f32 0.0, %v560
        %v562 = vpop.f32.mrb[0].mxu0
        %563 = vmatprep.mubr.f32.mxu0 0.0
        %564 = vmatmul.mubr.f32.gmra.mrb[0].mxu0 %v399
        %v565 = vpop.f32.mrb[0].mxu0
        %v566 = vadd.f32 0.0, %v565
        %v567 = vpop.f32.mrb[0].mxu0
        %568 = vmatprep.mubr.f32.mxu0 0.0
        %569 = vmatmul.mubr.f32.gmra.mrb[0].mxu0 %v400
        %v570 = vpop.f32.mrb[0].mxu0
        %v571 = vadd.f32 0.0, %v570
        %v572 = vpop.f32.mrb[0].mxu0
        %573 = vmatprep.mubr.f32.mxu0 0.0
        %574 = vmatmul.mubr.f32.gmra.mrb[0].mxu0 %v401
        %v575 = vpop.f32.mrb[0].mxu0
        %v576 = vadd.f32 0.0, %v575
        %v577 = vpop.f32.mrb[0].mxu0
        %578 = vmatprep.mubr.f32.mxu0 0.0
        %579 = vmatmul.mubr.f32.gmra.mrb[0].mxu0 %v402
        %v580 = vpop.f32.mrb[0].mxu0
        %v581 = vadd.f32 0.0, %v580
        %v582 = vpop.f32.mrb[0].mxu0
        %583 = vmatprep.mubr.f32.mxu0 0.0
        %584 = vmatmul.mubr.f32.gmra.mrb[0].mxu0 %v403
        %v585 = vpop.f32.mrb[0].mxu0
        %v586 = vadd.f32 0.0, %v585
        %v587 = vpop.f32.mrb[0].mxu0
        %588 = vmatprep.mubr.f32.mxu0 0.0
        %589 = vmatmul.mubr.f32.gmra.mrb[0].mxu0 %v404
        %v590 = vpop.f32.mrb[0].mxu0
        %v591 = vadd.f32 0.0, %v590
        %v592 = vpop.f32.mrb[0].mxu0
        %593 = vmatprep.mubr.f32.mxu0 0.0
        %594 = vmatmul.mubr.f32.gmra.mrb[0].mxu0 %v405
        %v595 = vpop.f32.mrb[0].mxu0
        %v596 = vadd.f32 0.0, %v595
        %v597 = vpop.f32.mrb[0].mxu0
        %598 = vmatprep.mubr.f32.mxu0 0.0
        %599 = vmatmul.mubr.f32.gmra.mrb[0].mxu0 %v406
        %v600 = vpop.f32.mrb[0].mxu0
        %v601 = vadd.f32 0.0, %v600
        %v602 = vpop.f32.mrb[0].mxu0
        %603 = vmatprep.mubr.f32.mxu0 0.0
        %604 = vmatmul.mubr.f32.gmra.mrb[0].mxu0 %v407
        %v605 = vpop.f32.mrb[0].mxu0
        %v606 = vadd.f32 0.0, %v605
        %v607 = vpop.f32.mrb[0].mxu0
        %608 = vmatprep.mubr.f32.mxu0 0.0
        %609 = vmatmul.mubr.f32.gmra.mrb[0].mxu0 %v408
        %v610 = vpop.f32.mrb[0].mxu0
        %v611 = vadd.f32 0.0, %v610
        %v612 = vpop.f32.mrb[0].mxu0
        %613 = vmatprep.mubr.f32.mxu0 0.0
        %614 = vmatmul.mubr.f32.gmra.mrb[0].mxu0 %v409
        %v615 = vpop.f32.mrb[0].mxu0
        %v616 = vadd.f32 0.0, %v615
        %v617 = vpop.f32.mrb[0].mxu0
        %618 = vmatprep.mubr.f32.mxu0 0.0
        %619 = vmatmul.mubr.f32.gmra.mrb[0].mxu0 %v410
        %v620 = vpop.f32.mrb[0].mxu0
        %v621 = vadd.f32 0.0, %v620
        %v622 = vpop.f32.mrb[0].mxu0
        %623 = vmatprep.mubr.f32.mxu0 0.0
        %624 = vmatmul.mubr.f32.gmra.mrb[0].mxu0 %v411
        %v625 = vpop.f32.mrb[0].mxu0
        %v626 = vadd.f32 0.0, %v625
        %v627 = vpop.f32.mrb[0].mxu0
        %628 = vmatprep.mubr.f32.mxu0 0.0
        %629 = vmatmul.mubr.f32.gmra.mrb[0].mxu0 %v412
        %v630 = vpop.f32.mrb[0].mxu0
        %v631 = vadd.f32 0.0, %v630
        %v632 = vpop.f32.mrb[0].mxu0
        %633 = vmatprep.mubr.f32.mxu0 0.0
        %634 = vmatmul.mubr.f32.gmra.mrb[0].mxu0 %v413
        %v635 = vpop.f32.mrb[0].mxu0
        %v636 = vadd.f32 0.0, %v635
        %v637 = vpop.f32.mrb[0].mxu0
        %638 = vdwg.mxu0
        %v639 = vmul.f32 %v481, %v481
        %v640 = vmul.f32 %v486, %v486
        %v641 = vmul.f32 %v491, %v491
        %v642 = vmul.f32 %v496, %v496
        %v643 = vmul.f32 %v501, %v501
        %v644 = vmul.f32 %v506, %v506
        %v645 = vmul.f32 %v511, %v511
        %v646 = vmul.f32 %v516, %v516
        %v647 = vmul.f32 %v521, %v521
        %v648 = vmul.f32 %v526, %v526
        %v649 = vmul.f32 %v531, %v531
        %v650 = vmul.f32 %v536, %v536
        %v651 = vmul.f32 %v541, %v541
        %v652 = vmul.f32 %v546, %v546
        %v653 = vmul.f32 %v551, %v551
        %v654 = vmul.f32 %v556, %v556
        %v655 = vmul.f32 %v561, %v561
        %v656 = vmul.f32 %v566, %v566
        %v657 = vmul.f32 %v571, %v571
        %v658 = vmul.f32 %v576, %v576
        %v659 = vmul.f32 %v581, %v581
        %v660 = vmul.f32 %v586, %v586
        %v661 = vmul.f32 %v591, %v591
        %v662 = vmul.f32 %v596, %v596
        %v663 = vmul.f32 %v601, %v601
        %v664 = vmul.f32 %v606, %v606
        %v665 = vmul.f32 %v611, %v611
        %v666 = vmul.f32 %v616, %v616
        %v667 = vmul.f32 %v621, %v621
        %v668 = vmul.f32 %v626, %v626
        %v669 = vmul.f32 %v631, %v631
        %v670 = vmul.f32 %v636, %v636
        %v671 = vadd.f32 %v639, %v655
        %v672 = vadd.f32 %v640, %v656
        %v673 = vadd.f32 %v641, %v657
        %v674 = vadd.f32 %v642, %v658
        %v675 = vadd.f32 %v643, %v659
        %v676 = vadd.f32 %v644, %v660
        %v677 = vadd.f32 %v645, %v661
        %v678 = vadd.f32 %v646, %v662
        %v679 = vadd.f32 %v647, %v663
        %v680 = vadd.f32 %v648, %v664
        %v681 = vadd.f32 %v649, %v665
        %v682 = vadd.f32 %v650, %v666
        %v683 = vadd.f32 %v651, %v667
        %v684 = vadd.f32 %v652, %v668
        %v685 = vadd.f32 %v653, %v669
        %v686 = vadd.f32 %v654, %v670
        %v687 = vrsqrt.pop %v671
        %v688 = vmul.f32 %v671, %v687
        %vm689 = vcmp.eq.f32.partialorder %v671, inf
        %v690 = vsel %vm689, %v671, %v688
        %vm691 = vcmp.eq.f32.partialorder %v671, 0.0
        %v692 = vand.u32 %v671, 2147483648
        %v693 = vsel %vm691, %v692, %v690
        %v694 = vrsqrt.pop %v672
        %v695 = vmul.f32 %v672, %v694
        %vm696 = vcmp.eq.f32.partialorder %v672, inf
        %v697 = vsel %vm696, %v672, %v695
        %vm698 = vcmp.eq.f32.partialorder %v672, 0.0
        %v699 = vand.u32 %v672, 2147483648
        %v700 = vsel %vm698, %v699, %v697
        %v701 = vrsqrt.pop %v673
        %v702 = vmul.f32 %v673, %v701
        %vm703 = vcmp.eq.f32.partialorder %v673, inf
        %v704 = vsel %vm703, %v673, %v702
        %vm705 = vcmp.eq.f32.partialorder %v673, 0.0
        %v706 = vand.u32 %v673, 2147483648
        %v707 = vsel %vm705, %v706, %v704
        %v708 = vrsqrt.pop %v674
        %v709 = vmul.f32 %v674, %v708
        %vm710 = vcmp.eq.f32.partialorder %v674, inf
        %v711 = vsel %vm710, %v674, %v709
        %vm712 = vcmp.eq.f32.partialorder %v674, 0.0
        %v713 = vand.u32 %v674, 2147483648
        %v714 = vsel %vm712, %v713, %v711
        %v715 = vrsqrt.pop %v675
        %v716 = vmul.f32 %v675, %v715
        %vm717 = vcmp.eq.f32.partialorder %v675, inf
        %v718 = vsel %vm717, %v675, %v716
        %vm719 = vcmp.eq.f32.partialorder %v675, 0.0
        %v720 = vand.u32 %v675, 2147483648
        %v721 = vsel %vm719, %v720, %v718
        %v722 = vrsqrt.pop %v676
        %v723 = vmul.f32 %v676, %v722
        %vm724 = vcmp.eq.f32.partialorder %v676, inf
        %v725 = vsel %vm724, %v676, %v723
        %vm726 = vcmp.eq.f32.partialorder %v676, 0.0
        %v727 = vand.u32 %v676, 2147483648
        %v728 = vsel %vm726, %v727, %v725
        %v729 = vrsqrt.pop %v677
        %v730 = vmul.f32 %v677, %v729
        %vm731 = vcmp.eq.f32.partialorder %v677, inf
        %v732 = vsel %vm731, %v677, %v730
        %vm733 = vcmp.eq.f32.partialorder %v677, 0.0
        %v734 = vand.u32 %v677, 2147483648
        %v735 = vsel %vm733, %v734, %v732
        %v736 = vrsqrt.pop %v678
        %v737 = vmul.f32 %v678, %v736
        %vm738 = vcmp.eq.f32.partialorder %v678, inf
        %v739 = vsel %vm738, %v678, %v737
        %vm740 = vcmp.eq.f32.partialorder %v678, 0.0
        %v741 = vand.u32 %v678, 2147483648
        %v742 = vsel %vm740, %v741, %v739
        %v743 = vrsqrt.pop %v679
        %v744 = vmul.f32 %v679, %v743
        %vm745 = vcmp.eq.f32.partialorder %v679, inf
        %v746 = vsel %vm745, %v679, %v744
        %vm747 = vcmp.eq.f32.partialorder %v679, 0.0
        %v748 = vand.u32 %v679, 2147483648
        %v749 = vsel %vm747, %v748, %v746
        %v750 = vrsqrt.pop %v680
        %v751 = vmul.f32 %v680, %v750
        %vm752 = vcmp.eq.f32.partialorder %v680, inf
        %v753 = vsel %vm752, %v680, %v751
        %vm754 = vcmp.eq.f32.partialorder %v680, 0.0
        %v755 = vand.u32 %v680, 2147483648
        %v756 = vsel %vm754, %v755, %v753
        %v757 = vrsqrt.pop %v681
        %v758 = vmul.f32 %v681, %v757
        %vm759 = vcmp.eq.f32.partialorder %v681, inf
        %v760 = vsel %vm759, %v681, %v758
        %vm761 = vcmp.eq.f32.partialorder %v681, 0.0
        %v762 = vand.u32 %v681, 2147483648
        %v763 = vsel %vm761, %v762, %v760
        %v764 = vrsqrt.pop %v682
        %v765 = vmul.f32 %v682, %v764
        %vm766 = vcmp.eq.f32.partialorder %v682, inf
        %v767 = vsel %vm766, %v682, %v765
        %vm768 = vcmp.eq.f32.partialorder %v682, 0.0
        %v769 = vand.u32 %v682, 2147483648
        %v770 = vsel %vm768, %v769, %v767
        %v771 = vrsqrt.pop %v683
        %v772 = vmul.f32 %v683, %v771
        %vm773 = vcmp.eq.f32.partialorder %v683, inf
        %v774 = vsel %vm773, %v683, %v772
        %vm775 = vcmp.eq.f32.partialorder %v683, 0.0
        %v776 = vand.u32 %v683, 2147483648
        %v777 = vsel %vm775, %v776, %v774
        %v778 = vrsqrt.pop %v684
        %v779 = vmul.f32 %v684, %v778
        %vm780 = vcmp.eq.f32.partialorder %v684, inf
        %v781 = vsel %vm780, %v684, %v779
        %vm782 = vcmp.eq.f32.partialorder %v684, 0.0
        %v783 = vand.u32 %v684, 2147483648
        %v784 = vsel %vm782, %v783, %v781
        %v785 = vrsqrt.pop %v685
        %v786 = vmul.f32 %v685, %v785
        %vm787 = vcmp.eq.f32.partialorder %v685, inf
        %v788 = vsel %vm787, %v685, %v786
        %vm789 = vcmp.eq.f32.partialorder %v685, 0.0
        %v790 = vand.u32 %v685, 2147483648
        %v791 = vsel %vm789, %v790, %v788
        %v792 = vrsqrt.pop %v686
        %v793 = vmul.f32 %v686, %v792
        %vm794 = vcmp.eq.f32.partialorder %v686, inf
        %v795 = vsel %vm794, %v686, %v793
        %vm796 = vcmp.eq.f32.partialorder %v686, 0.0
        %v797 = vand.u32 %v686, 2147483648
        %v798 = vsel %vm796, %v797, %v795
        %v799 = vld [vmem:[#allocation8] sm:$0xff]
        %v800 = vld [vmem:[#allocation8 + $0x8] sm:$0xff]
        %801 = vmatprep.subr.mxu0 0.0
        %802 = vmatpush1.msra.mxu0 %v693
        %803 = vmatprep.subr.mxu0 0.0
        %804 = vmatpush1.msra.mxu0 %v700
        %805 = vmatprep.subr.mxu0 0.0
        %806 = vmatpush1.msra.mxu0 %v707
        %807 = vmatprep.subr.mxu0 0.0
        %808 = vmatpush1.msra.mxu0 %v714
        %809 = vmatprep.subr.mxu0 0.0
        %810 = vmatpush1.msra.mxu0 %v721
        %811 = vmatprep.subr.mxu0 0.0
        %812 = vmatpush1.msra.mxu0 %v728
        %813 = vmatprep.subr.mxu0 0.0
        %814 = vmatpush1.msra.mxu0 %v735
        %815 = vmatprep.subr.mxu0 0.0
        %816 = vmatpush1.msra.mxu0 %v742
        %817 = vmatprep.subr.mxu0 0.0
        %818 = vmatpush1.msra.mxu0 %v749
        %819 = vmatprep.subr.mxu0 0.0
        %820 = vmatpush1.msra.mxu0 %v756
        %821 = vmatprep.subr.mxu0 0.0
        %822 = vmatpush1.msra.mxu0 %v763
        %823 = vmatprep.subr.mxu0 0.0
        %824 = vmatpush1.msra.mxu0 %v770
        %825 = vmatprep.subr.mxu0 0.0
        %826 = vmatpush1.msra.mxu0 %v777
        %827 = vmatprep.subr.mxu0 0.0
        %828 = vmatpush1.msra.mxu0 %v784
        %829 = vmatprep.subr.mxu0 0.0
        %830 = vmatpush1.msra.mxu0 %v791
        %831 = vmatprep.subr.mxu0 0.0
        %832 = vmatpush1.msra.mxu0 %v798
        %833 = vmatprep.subr.mxu0 0.0
        %834 = vmatpush1.msra.mxu0 0.0
        %835 = vmatprep.subr.mxu0 0.0
        %836 = vmatpush1.msra.mxu0 0.0
        %837 = vmatprep.subr.mxu0 0.0
        %838 = vmatpush1.msra.mxu0 0.0
        %839 = vmatprep.subr.mxu0 0.0
        %840 = vmatpush1.msra.mxu0 0.0
        %841 = vmatprep.subr.mxu0 0.0
        %842 = vmatpush1.msra.mxu0 0.0
        %843 = vmatprep.subr.mxu0 0.0
        %844 = vmatpush1.msra.mxu0 0.0
        %845 = vmatprep.subr.mxu0 0.0
        %846 = vmatpush1.msra.mxu0 0.0
        %847 = vmatprep.subr.mxu0 0.0
        %848 = vmatpush1.msra.mxu0 0.0
        %849 = vmatprep.subr.mxu0 0.0
        %850 = vmatpush1.msra.mxu0 0.0
        %851 = vmatprep.subr.mxu0 0.0
        %852 = vmatpush1.msra.mxu0 0.0
        %853 = vmatprep.subr.mxu0 0.0
        %854 = vmatpush1.msra.mxu0 0.0
        %855 = vmatprep.subr.mxu0 0.0
        %856 = vmatpush1.msra.mxu0 0.0
        %857 = vmatprep.subr.mxu0 0.0
        %858 = vmatpush1.msra.mxu0 0.0
        %859 = vmatprep.subr.mxu0 0.0
        %860 = vmatpush1.msra.mxu0 0.0
        %861 = vmatprep.subr.mxu0 0.0
        %862 = vmatpush1.msra.mxu0 0.0
        %863 = vmatprep.subr.mxu0 0.0
        %864 = vmatpush1.msra.mxu0 0.0
        %865 = vmatprep.mubr.f32.mxu0 0.0
        %866 = vmatmul.mubr.f32.gmra.mrb[0].mxu0 %v799
        %v867 = vpop.f32.mrb[0].mxu0
        %v868 = vadd.f32 0.0, %v867
        %v869 = vpop.f32.mrb[0].mxu0
        %870 = vmatprep.mubr.f32.mxu0 0.0
        %871 = vmatmul.mubr.f32.gmra.mrb[0].mxu0 %v800
        %v872 = vpop.f32.mrb[0].mxu0
        %v873 = vadd.f32 0.0, %v872
        %v874 = vpop.f32.mrb[0].mxu0
        %875 = vdwg.mxu0
        %v876 = vmax.f32 %v868, 1e-05
        %v877 = vmax.f32 %v873, 1e-05
        %v878 = vlog2.pop %v876
        %v879 = vmul.f32 %v878, 0.6931472
        %v880 = vlog2.pop %v877
        %v881 = vmul.f32 %v880, 0.6931472
        %882 = vst [vmem:[%s307] sm:$0xff] %v879
        %883 = vst [vmem:[%s307 + $0x8] sm:$0xff] %v881
        %s884 = sand.u32 %s147, 1
        %s885 = scalar_lea.sflag [#allocation4], %s884
        %s886 = sand.u32 %s147, 1
        %s887 = smul.addr %s886, 16
        %s888 = scalar_lea.vmem [#allocation10], %s887
        // Predicated region
        $region53: #{tpu_custom_call.1} parent=35 // pred_check
          %p889 = pneg %p157
        $region54: #{tpu_custom_call.1} parent=35 // pred_check_branch
          %891 = sbr.rel (%p889) target = $region56
        $region55: #{tpu_custom_call.1} parent=35 // pred_region
          %s893 = ssub.s32 256, 256
          %894 = vsyncadd %s885, %s893
          %s895 = smul.addr %s29, 2
          %s896 = sadd.s32 %s30, %s895
          %s897 = smul.addr %s896, 128
          %s898 = scalar_lea.hbm %s4, %s897
          %s899 = sshll.u32 %s888, 4
          %s900 = int_to_ptr.vmem [resolvable:$true] %s899
          %905 = dma.vmem_to_hbm [thread:$0]  %s900, 256, %s898, %s885, 128, 128, 8
        $region56: #{tpu_custom_call.1} parent=35 // pred_fallthru
          _
      $region36: #{tpu_custom_call.1} parent=5 // pred_fallthru
        _
      %p906 = scmp.le.s32.totalorder 2, %s20
      // Predicated region
      $region57: #{tpu_custom_call.1} parent=5 // pred_check
        %p907 = pneg %p906
      $region58: #{tpu_custom_call.1} parent=5 // pred_check_branch
        %909 = sbr.rel (%p907) target = $region60
      $region59: #{tpu_custom_call.1} parent=5 // pred_region
        %s910 = ssub.s32 %s20, 2
        // Predicated region
        $region61: #{tpu_custom_call.1} parent=59 // pred_check
          %p911 = pneg %p163
        $region62: #{tpu_custom_call.1} parent=59 // pred_check_branch
          %913 = sbr.rel (%p911) target = $region64
        $region63: #{tpu_custom_call.1} parent=59 // pred_region
          %s914 = sand.u32 %s148, 1
          %s915 = scalar_lea.sflag [#allocation4], %s914
          %s916 = sand.u32 %s148, 1
          %s917 = smul.addr %s916, 16
          %s918 = scalar_lea.vmem [#allocation10], %s917
          %919 = dma.done %s915, 256
        $region64: #{tpu_custom_call.1} parent=59 // pred_fallthru
          _
      $region60: #{tpu_custom_call.1} parent=5 // pred_fallthru
        _
    $region6: #{tpu_custom_call.1} parent=1 // loop_footer
      %s24 = sadd.s32 1, %s20
    $region7: #{tpu_custom_call.1} parent=1 // loop_footer_branch
      %19 = sbr.rel target = $region3
    $region8: #{tpu_custom_call.1} parent=1 // loop_exit
      _
    %920 = vsyncpa [#allocation3], 1
    %s921 = scalar_lea.sflag [#allocation3], 1
    %922 = vsyncpa %s921, 1
    %923 = vsyncpa [#allocation6], 1
    %s924 = scalar_lea.sflag [#allocation6], 1
    %925 = vsyncpa %s924, 1
    %926 = vsyncpa [#allocation9], 1
    %927 = vsyncpa [#allocation4], 1
    %s928 = scalar_lea.sflag [#allocation4], 1
    %929 = vsyncpa %s928, 1

</llo_original>
